<compile_context>
chip_gen: v7x
topology: tpu7x:2x2x1
jax: 0.10.0
libtpu: 0.0.40
codegen_flags: <defaults>
</compile_context>

<pallas_src>
import functools

import jax
import jax.numpy as jnp
from jax.experimental import pallas as pl
from jax.experimental.pallas import tpu as pltpu

LANE = 128          # lane width (last-dim tile)
MAX_TILE_R = 1024   # rows per grid step: 1024*128*4B = 512 KiB per input block
                    # (2 inputs x 2 buffers + acc ~ 2.5 MiB: safe on v5e/v6e/v7x)


def _mse_kernel(a_ref, b_ref, o_ref, acc_ref, *,
                total_rows, tile_r, steps_per_core, needs_mask):
    """Per-core partial sum of (a - b)^2 over its half of the row range."""
    core = pl.program_id(0)   # "parallel" axis (TensorCore split on v7x)
    step = pl.program_id(1)   # "arbitrary" reduction axis

    @pl.when(step == 0)
    def _init():
        acc_ref[...] = jnp.zeros_like(acc_ref)

    diff = a_ref[...].astype(jnp.float32) - b_ref[...].astype(jnp.float32)
    sq = diff * diff

    if needs_mask:
        # Zero contributions from rows past the true extent: the (possibly)
        # partial last tile and any clamped duplicate tile on the second core.
        row0 = (core * steps_per_core + step) * tile_r
        rid = jax.lax.broadcasted_iota(jnp.int32, sq.shape, 0) + row0
        sq = jnp.where(rid < total_rows, sq, 0.0)

    acc_ref[...] += sq            # pure VPU elementwise accumulate

    @pl.when(step == pl.num_programs(1) - 1)
    def _finalize():
        o_ref[...] = jnp.sum(acc_ref[...]).reshape(1, 1, 1)


def mse_loss(img1, img2):
    assert img1.shape == img2.shape
    n_elems = img1.size

    f1 = img1.reshape(-1)
    f2 = img2.reshape(-1)

    rows = n_elems // LANE
    main = rows * LANE

    # Sub-128 lane tail (< 128 elements): tiny, handle in plain JAX — avoids
    # the full-array jnp.pad copy of the previous version.
    if main < n_elems:
        t1 = f1[main:].astype(jnp.float32)
        t2 = f2[main:].astype(jnp.float32)
        tail_sum = jnp.sum((t1 - t2) ** 2)
    else:
        tail_sum = jnp.float32(0.0)

    if rows == 0:
        total = tail_sum  # input smaller than one lane row
    else:
        if main == n_elems:
            a2d = f1.reshape(rows, LANE)   # free reshape of contiguous data
            b2d = f2.reshape(rows, LANE)
        else:
            # TODO(synk): prefix slice may materialize a copy for non-128-aligned sizes.
            a2d = f1[:main].reshape(rows, LANE)
            b2d = f2[:main].reshape(rows, LANE)

        # Full-extent block if small, else a 1024-row (512 KiB) tile.
        tile_r = rows if rows < MAX_TILE_R else MAX_TILE_R
        grid_r = pl.cdiv(rows, tile_r)           # row-blocks in the array
        steps_per_core = pl.cdiv(grid_r, 2)      # split across (up to) 2 TCs
        grid = (2, steps_per_core)
        needs_mask = (2 * steps_per_core * tile_r) != rows

        def in_map(c, i):
            # Clamp so we never address a fully out-of-bounds block; the
            # duplicate read on the second core is zeroed by the in-kernel mask.
            return (jnp.minimum(c * steps_per_core + i, grid_r - 1), 0)

        kernel = functools.partial(
            _mse_kernel,
            total_rows=rows,
            tile_r=tile_r,
            steps_per_core=steps_per_core,
            needs_mask=needs_mask,
        )

        partials = pl.pallas_call(
            kernel,
            out_shape=jax.ShapeDtypeStruct((2, 1, 1), jnp.float32),
            grid_spec=pltpu.PrefetchScalarGridSpec(
                num_scalar_prefetch=0,
                grid=grid,
                in_specs=[
                    pl.BlockSpec((tile_r, LANE), in_map),
                    pl.BlockSpec((tile_r, LANE), in_map),
                ],
                out_specs=pl.BlockSpec((1, 1, 1), lambda c, i: (c, 0, 0)),
                scratch_shapes=[pltpu.VMEM((tile_r, LANE), jnp.float32)],
            ),
            compiler_params=pltpu.CompilerParams(
                dimension_semantics=("parallel", "arbitrary"),
            ),
        )(a2d, b2d)

        total = partials[:, 0, 0].sum() + tail_sum

    # mean over the original element count
    return (total / jnp.float32(n_elems)).astype(img1.dtype)


if __name__ == "__main__":
    key = jax.random.PRNGKey(0)
    k1, k2 = jax.random.split(key)
    img1 = jax.random.normal(k1, (2, 4, 16, 16), dtype=jnp.float32)
    img2 = jax.random.normal(k2, (2, 4, 16, 16), dtype=jnp.float32)

    loss = mse_loss(img1, img2)
    jax.block_until_ready(loss)

    # sanity check against pure-JAX reference
    ref = jnp.mean((img1 - img2) ** 2)
    assert jnp.allclose(loss, ref, rtol=1e-5, atol=1e-6), (loss, ref)

    print("KERNEL_OK")
</pallas_src>

<mosaic_0001>
module attributes {stable_mosaic.version = 11 : i64} {
  func.func @_mse_kernel(%arg0: i32, %arg1: i32, %arg2: memref<16x128xf32, #tpu.memory_space<vmem>>, %arg3: memref<16x128xf32, #tpu.memory_space<vmem>>, %arg4: memref<1x1x1xf32, #tpu.memory_space<vmem>>, %arg5: memref<16x128xf32, #tpu.memory_space<vmem>>) attributes {dimension_semantics = [#tpu.dimension_semantics<parallel>, #tpu.dimension_semantics<arbitrary>], iteration_bounds = array<i64: 2, 1>, scalar_prefetch = 0 : i64, scratch_operands = 1 : i64, tpu.core_type = #tpu.core_type<tc>, window_params = [{transform_indices = @transform_0, window_bounds = array<i64: 16, 128>}, {transform_indices = @transform_1, window_bounds = array<i64: 16, 128>}, {transform_indices = @transform_2, window_bounds = array<i64: 1, 1, 1>}]} {
    %c0_i32 = arith.constant 0 : i32
    %0 = arith.cmpi eq, %arg1, %c0_i32 : i32
    %1 = arith.extui %0 : i1 to i32
    %c0_i32_0 = arith.constant 0 : i32
    %2 = arith.cmpi ne, %1, %c0_i32_0 : i32
    scf.if %2 {
      %cst_11 = arith.constant 0.000000e+00 : f32
      %23 = vector.broadcast %cst_11 : f32 to vector<16x128xf32>
      %c0_12 = arith.constant 0 : index
      %c0_13 = arith.constant 0 : index
      %24 = vector.load %arg5[%c0_12, %c0_13] : memref<16x128xf32, #tpu.memory_space<vmem>>, vector<16x128xf32>
      tpu.vector_store %arg5[%c0_12, %c0_13], %23 {strides = array<i32>} : memref<16x128xf32, #tpu.memory_space<vmem>>, vector<16x128xf32>,
    } else {
    }
    %c0 = arith.constant 0 : index
    %c0_1 = arith.constant 0 : index
    %3 = vector.load %arg2[%c0, %c0_1] : memref<16x128xf32, #tpu.memory_space<vmem>>, vector<16x128xf32>
    %c0_2 = arith.constant 0 : index
    %c0_3 = arith.constant 0 : index
    %4 = vector.load %arg3[%c0_2, %c0_3] : memref<16x128xf32, #tpu.memory_space<vmem>>, vector<16x128xf32>
    %5 = arith.subf %3, %4 : vector<16x128xf32>
    %6 = arith.mulf %5, %5 : vector<16x128xf32>
    %c1_i32 = arith.constant 1 : i32
    %7 = arith.muli %arg0, %c1_i32 : i32
    %8 = arith.addi %7, %arg1 : i32
    %c16_i32 = arith.constant 16 : i32
    %9 = arith.muli %8, %c16_i32 : i32
    %10 = tpu.iota {dimensions = array<i32: 0>} : vector<16x128xi32>
    %11 = vector.broadcast %9 : i32 to vector<16x128xi32>
    %12 = arith.addi %10, %11 : vector<16x128xi32>
    %c16_i32_4 = arith.constant 16 : i32
    %13 = vector.broadcast %c16_i32_4 : i32 to vector<16x128xi32>
    %14 = arith.cmpi slt, %12, %13 : vector<16x128xi32>
    %cst = arith.constant 0.000000e+00 : f32
    %15 = vector.broadcast %cst : f32 to vector<16x128xf32>
    %16 = arith.select %14, %6, %15 : vector<16x128xi1>, vector<16x128xf32>
    %c0_5 = arith.constant 0 : index
    %c0_6 = arith.constant 0 : index
    %17 = vector.load %arg5[%c0_5, %c0_6] : memref<16x128xf32, #tpu.memory_space<vmem>>, vector<16x128xf32>
    %18 = arith.addf %17, %16 : vector<16x128xf32>
    %c0_7 = arith.constant 0 : index
    %c0_8 = arith.constant 0 : index
    %19 = vector.load %arg5[%c0_7, %c0_8] : memref<16x128xf32, #tpu.memory_space<vmem>>, vector<16x128xf32>
    tpu.vector_store %arg5[%c0_7, %c0_8], %18 {strides = array<i32>} : memref<16x128xf32, #tpu.memory_space<vmem>>, vector<16x128xf32>,
    %c0_i32_9 = arith.constant 0 : i32
    %20 = arith.cmpi eq, %arg1, %c0_i32_9 : i32
    %21 = arith.extui %20 : i1 to i32
    %c0_i32_10 = arith.constant 0 : i32
    %22 = arith.cmpi ne, %21, %c0_i32_10 : i32
    scf.if %22 {
      %c0_11 = arith.constant 0 : index
      %c0_12 = arith.constant 0 : index
      %23 = vector.load %arg5[%c0_11, %c0_12] : memref<16x128xf32, #tpu.memory_space<vmem>>, vector<16x128xf32>
      %24 = vector.shape_cast %23 : vector<16x128xf32> to vector<1x16x128xf32>
      %cst_13 = arith.constant dense<0.000000e+00> : vector<1xf32>
      %25 = vector.multi_reduction <add>, %24, %cst_13 [1, 2] : vector<1x16x128xf32> to vector<1xf32>
      %26 = vector.shape_cast %25 : vector<1xf32> to vector<1x1x1xf32>
      %27 = vector.extract %26[0, 0, 0] : f32 from vector<1x1x1xf32>
      %28 = vector.broadcast %27 : f32 to vector<1x1x1xf32>
      %c0_14 = arith.constant 0 : index
      %c0_15 = arith.constant 0 : index
      %c0_16 = arith.constant 0 : index
      %29 = vector.load %arg4[%c0_14, %c0_15, %c0_16] : memref<1x1x1xf32, #tpu.memory_space<vmem>>, vector<1x1x1xf32>
      tpu.vector_store %arg4[%c0_14, %c0_15, %c0_16], %28 {strides = array<i32>} : memref<1x1x1xf32, #tpu.memory_space<vmem>>, vector<1x1x1xf32>,
    } else {
    }
    return
  }
  func.func @transform_0(%arg0: i32, %arg1: i32) -> (i32, i32) {
    %c1_i32 = arith.constant 1 : i32
    %0 = arith.muli %arg0, %c1_i32 : i32
    %1 = arith.addi %0, %arg1 : i32
    %c0_i32 = arith.constant 0 : i32
    %2 = arith.minsi %1, %c0_i32 : i32
    %c0_i32_0 = arith.constant 0 : i32
    %c0_i32_1 = arith.constant 0 : i32
    return %2, %c0_i32_0 : i32, i32
  }
  func.func @transform_1(%arg0: i32, %arg1: i32) -> (i32, i32) {
    %c1_i32 = arith.constant 1 : i32
    %0 = arith.muli %arg0, %c1_i32 : i32
    %1 = arith.addi %0, %arg1 : i32
    %c0_i32 = arith.constant 0 : i32
    %2 = arith.minsi %1, %c0_i32 : i32
    %c0_i32_0 = arith.constant 0 : i32
    %c0_i32_1 = arith.constant 0 : i32
    return %2, %c0_i32_0 : i32, i32
  }
  func.func @transform_2(%arg0: i32, %arg1: i32) -> (i32, i32, i32) {
    %c0_i32 = arith.constant 0 : i32
    %c0_i32_0 = arith.constant 0 : i32
    %c0_i32_1 = arith.constant 0 : i32
    return %arg0, %c0_i32, %c0_i32_0 : i32, i32, i32
  }
}

</mosaic_0001>

<llo_original>
// kernel: tpu_custom_call.1
$region0: #{tpu_custom_call.1}
  #allocation0 [shape = 'u32[]', space=smem, size = 0x4, offset = 0x4, fixed_abs, tag = 'smem constant byte address 0x4 - core index']
  #allocation1 [shape = 'u32[144,128]{1,0:T(1,128)}', space=vmem, size = 0x12000, scoped, tag = 'internal scratch']
  #allocation2 [shape = 'f32[16,128]{1,0:T(8,128)}', space=vmem, size = 0x2000, scoped, tag = 'scratch operand']
  %s0 = inlined_call_operand.hbm [shape: f32[16,128], index: 0, kind: input, shape index: {}]
  %s1 = inlined_call_operand.hbm [shape: f32[16,128], index: 1, kind: input, shape index: {}]
  %s2 = inlined_call_operand.vmem [shape: f32[2,1,1], index: 2, kind: output, shape index: {}]
  %s3 = sld [smem:[#allocation0]]
  $region57: #{tpu_custom_call.1} parent=0
    _
  %s5 = ssub.s32 1, %s3
  %s6 = scalar_select 0, %s5, %s3
  $region1: #{tpu_custom_call.1} parent=0
    #allocation3 [shape = 'u8[16384]{0}', space=vmem, size = 0x4000, scoped, tag = 'input window, operand 0']
    #allocation4 [shape = 's32[2]{0}', space=sflag, size = 0x8, scoped, tag = 'scoped memory for tpu_custom_call.1']
    #allocation5 [shape = 'u8[16384]{0}', space=vmem, size = 0x4000, scoped, tag = 'input window, operand 1']
    #allocation6 [shape = 's32[2]{0}', space=sflag, size = 0x8, scoped, tag = 'scoped memory for tpu_custom_call.1']
    %7 = vsyncpa [#allocation4], 0
    %s8 = scalar_lea.sflag [#allocation4], 1
    %9 = vsyncpa %s8, 0
    %10 = vsyncpa [#allocation6], 0
    %s11 = scalar_lea.sflag [#allocation6], 1
    %12 = vsyncpa %s11, 0
    loop: start=0, step=1, limit=4
    $region2: #{tpu_custom_call.1} parent=1 // loop_pre_header
      _
    $region3: #{tpu_custom_call.1} parent=1 // loop_header
      %s14 = sphi 0, %s18
      %p15 = scmp.ge.s32.totalorder %s14, 4
      %s21 = sphi 0, %s33
      %s22 = sphi 0, %s29
      %s23 = sphi 0, %s21
      %s24 = sphi 0, %s22
      %s25 = sphi 0, %s23
      %s26 = sphi 0, %s24
      %s42 = sphi 0, %s44
      %s45 = sphi 0, %s42
      %s46 = sphi 0, %s45
      %s62 = sphi 0, %s46
      %s74 = sphi 0, %s76
      %s77 = sphi 0, %s74
      %s78 = sphi 0, %s77
      %s94 = sphi 0, %s78
      %s100 = sphi 0, %s102
      %s103 = sphi 0, %s100
      %s104 = sphi 0, %s103
      %s120 = sphi 0, %s104
    $region4: #{tpu_custom_call.1} parent=1 // loop_header_branch
      %17 = sbr.rel (%p15) target = $region8
    $region5: #{tpu_custom_call.1} parent=1 // loop_body
      %s19 = ssub.s32 %s14, 1
      %s20 = ssub.s32 %s14, 2
      %s27 = sadd.s32 1, %s22
      %p28 = scmp.ge.s32.totalorder %s27, 1
      %s29 = scalar_select %p28, 0, %s27
      %s30 = sadd.s32 1, %s21
      %s31 = scalar_select %p28, %s30, %s21
      %p32 = scmp.ge.s32.totalorder %s31, 2
      %s33 = scalar_select %p32, 0, %s31
      %s34 = sadd.s32 %s21, %s22
      %p35 = scmp.lt.s32.totalorder %s34, 0
      %s36 = scalar_select %p35, %s34, 0
      %s37 = sadd.s32 %s33, %s29
      %p38 = scmp.lt.s32.totalorder %s37, 0
      %s39 = scalar_select %p38, %s37, 0
      %s40 = ssub.s32 %s36, %s39
      %p41 = scmp.eq.s32.totalorder %s40, 0
      %s43 = sadd.s32 %s42, 1
      %s44 = scalar_select %p41, %s42, %s43
      %p47 = pneg %p41
      %p48 = scmp.eq.s32.totalorder %s14, 1
      %p49 = por %p47, %p48
      %p50 = scmp.ne.s32.totalorder %s42, %s45
      %p51 = scmp.eq.s32.totalorder %s14, 0
      %p52 = por %p50, %p51
      %p53 = scmp.ne.s32.totalorder %s42, %s45
      %p54 = scmp.eq.s32.totalorder %s19, 1
      %p55 = por %p53, %p54
      %p56 = scmp.ne.s32.totalorder %s45, %s46
      %p57 = scmp.eq.s32.totalorder %s19, 0
      %p58 = por %p56, %p57
      %p59 = scmp.ne.s32.totalorder %s45, %s46
      %p60 = scmp.eq.s32.totalorder %s20, 1
      %p61 = por %p59, %p60
      %p63 = scmp.ne.s32.totalorder %s46, %s62
      %p64 = scmp.eq.s32.totalorder %s20, 0
      %p65 = por %p63, %p64
      %s66 = sadd.s32 %s21, %s22
      %p67 = scmp.lt.s32.totalorder %s66, 0
      %s68 = scalar_select %p67, %s66, 0
      %s69 = sadd.s32 %s33, %s29
      %p70 = scmp.lt.s32.totalorder %s69, 0
      %s71 = scalar_select %p70, %s69, 0
      %s72 = ssub.s32 %s68, %s71
      %p73 = scmp.eq.s32.totalorder %s72, 0
      %s75 = sadd.s32 %s74, 1
      %s76 = scalar_select %p73, %s74, %s75
      %p79 = pneg %p73
      %p80 = scmp.eq.s32.totalorder %s14, 1
      %p81 = por %p79, %p80
      %p82 = scmp.ne.s32.totalorder %s74, %s77
      %p83 = scmp.eq.s32.totalorder %s14, 0
      %p84 = por %p82, %p83
      %p85 = scmp.ne.s32.totalorder %s74, %s77
      %p86 = scmp.eq.s32.totalorder %s19, 1
      %p87 = por %p85, %p86
      %p88 = scmp.ne.s32.totalorder %s77, %s78
      %p89 = scmp.eq.s32.totalorder %s19, 0
      %p90 = por %p88, %p89
      %p91 = scmp.ne.s32.totalorder %s77, %s78
      %p92 = scmp.eq.s32.totalorder %s20, 1
      %p93 = por %p91, %p92
      %p95 = scmp.ne.s32.totalorder %s78, %s94
      %p96 = scmp.eq.s32.totalorder %s20, 0
      %p97 = por %p95, %p96
      %s98 = ssub.s32 %s21, %s33
      %p99 = scmp.eq.s32.totalorder %s98, 0
      %s101 = sadd.s32 %s100, 1
      %s102 = scalar_select %p99, %s100, %s101
      %p105 = pneg %p99
      %p106 = scmp.eq.s32.totalorder %s14, 1
      %p107 = por %p105, %p106
      %p108 = scmp.ne.s32.totalorder %s100, %s103
      %p109 = scmp.eq.s32.totalorder %s14, 0
      %p110 = por %p108, %p109
      %p111 = scmp.ne.s32.totalorder %s100, %s103
      %p112 = scmp.eq.s32.totalorder %s19, 1
      %p113 = por %p111, %p112
      %p114 = scmp.ne.s32.totalorder %s103, %s104
      %p115 = scmp.eq.s32.totalorder %s19, 0
      %p116 = por %p114, %p115
      %p117 = scmp.ne.s32.totalorder %s103, %s104
      %p118 = scmp.eq.s32.totalorder %s20, 1
      %p119 = por %p117, %p118
      %p121 = scmp.ne.s32.totalorder %s104, %s120
      %p122 = scmp.eq.s32.totalorder %s20, 0
      %p123 = por %p121, %p122
      %p124 = scmp.le.s32.totalorder 1, %s14
      %p125 = scmp.lt.s32.totalorder %s14, 3
      %p126 = pnand %p124, %p125
      %p127 = pneg %p126
      // Predicated region
      $region9: #{tpu_custom_call.1} parent=5 // pred_check
        _
      $region10: #{tpu_custom_call.1} parent=5 // pred_check_branch
        %129 = sbr.rel (%p126) target = $region12
      $region11: #{tpu_custom_call.1} parent=5 // pred_region
        %s130 = ssub.s32 %s14, 1
      $region12: #{tpu_custom_call.1} parent=5 // pred_fallthru
        _
      %p131 = scmp.lt.s32.totalorder %s14, 2
      // Predicated region
      $region13: #{tpu_custom_call.1} parent=5 // pred_check
        %p132 = pneg %p131
      $region14: #{tpu_custom_call.1} parent=5 // pred_check_branch
        %134 = sbr.rel (%p132) target = $region16
      $region15: #{tpu_custom_call.1} parent=5 // pred_region
        // Predicated region
        $region17: #{tpu_custom_call.1} parent=15 // pred_check
          %p135 = pneg %p52
        $region18: #{tpu_custom_call.1} parent=15 // pred_check_branch
          %137 = sbr.rel (%p135) target = $region20
        $region19: #{tpu_custom_call.1} parent=15 // pred_region
          %s138 = sand.u32 %s42, 1
          %s139 = scalar_lea.sflag [#allocation4], %s138
          %s140 = sand.u32 %s42, 1
          %s141 = smul.addr %s140, 16
          %s142 = scalar_lea.vmem [#allocation3], %s141
          %s143 = sadd.s32 %s21, %s22
          %p144 = scmp.lt.s32.totalorder %s143, 0
          %s145 = scalar_select %p144, %s143, 0
          %s146 = smul.u32 2, %s145
          %s148 = ssub.s32 256, 256
          %149 = vsyncadd %s139, %s148
          %s150 = smul.addr %s146, 128
          %s151 = scalar_lea.hbm %s0, %s150
          %s152 = sshll.u32 %s142, 4
          %s153 = int_to_ptr.vmem [resolvable:$true] %s152
          %158 = dma.hbm_to_vmem [thread:$0]  %s151, 256, %s153, %s139, 128, 128, 8
        $region20: #{tpu_custom_call.1} parent=15 // pred_fallthru
          _
        // Predicated region
        $region21: #{tpu_custom_call.1} parent=15 // pred_check
          %p159 = pneg %p84
        $region22: #{tpu_custom_call.1} parent=15 // pred_check_branch
          %161 = sbr.rel (%p159) target = $region24
        $region23: #{tpu_custom_call.1} parent=15 // pred_region
          %s162 = sand.u32 %s74, 1
          %s163 = scalar_lea.sflag [#allocation6], %s162
          %s164 = sand.u32 %s74, 1
          %s165 = smul.addr %s164, 16
          %s166 = scalar_lea.vmem [#allocation5], %s165
          %s167 = sadd.s32 %s21, %s22
          %p168 = scmp.lt.s32.totalorder %s167, 0
          %s169 = scalar_select %p168, %s167, 0
          %s170 = smul.u32 2, %s169
          %s172 = ssub.s32 256, 256
          %173 = vsyncadd %s163, %s172
          %s174 = smul.addr %s170, 128
          %s175 = scalar_lea.hbm %s1, %s174
          %s176 = sshll.u32 %s166, 4
          %s177 = int_to_ptr.vmem [resolvable:$true] %s176
          %182 = dma.hbm_to_vmem [thread:$0]  %s175, 256, %s177, %s163, 128, 128, 8
        $region24: #{tpu_custom_call.1} parent=15 // pred_fallthru
          _
      $region16: #{tpu_custom_call.1} parent=5 // pred_fallthru
        _
      %p183 = scmp.le.s32.totalorder 1, %s14
      %p184 = scmp.lt.s32.totalorder %s14, 3
      %p185 = pnand %p183, %p184
      %p186 = pneg %p185
      // Predicated region
      $region25: #{tpu_custom_call.1} parent=5 // pred_check
        _
      $region26: #{tpu_custom_call.1} parent=5 // pred_check_branch
        %188 = sbr.rel (%p185) target = $region28
      $region27: #{tpu_custom_call.1} parent=5 // pred_region
        %s189 = ssub.s32 %s14, 1
        %s190 = sand.u32 %s45, 1
        %s191 = scalar_lea.sflag [#allocation4], %s190
        %s192 = sand.u32 %s45, 1
        %s193 = smul.addr %s192, 16
        %s194 = scalar_lea.vmem [#allocation3], %s193
        // Predicated region
        $region29: #{tpu_custom_call.1} parent=27 // pred_check
          %p195 = pneg %p58
        $region30: #{tpu_custom_call.1} parent=27 // pred_check_branch
          %197 = sbr.rel (%p195) target = $region32
        $region31: #{tpu_custom_call.1} parent=27 // pred_region
          %198 = dma.done %s191, 256
        $region32: #{tpu_custom_call.1} parent=27 // pred_fallthru
          _
        %s199 = sand.u32 %s77, 1
        %s200 = scalar_lea.sflag [#allocation6], %s199
        %s201 = sand.u32 %s77, 1
        %s202 = smul.addr %s201, 16
        %s203 = scalar_lea.vmem [#allocation5], %s202
        // Predicated region
        $region33: #{tpu_custom_call.1} parent=27 // pred_check
          %p204 = pneg %p90
        $region34: #{tpu_custom_call.1} parent=27 // pred_check_branch
          %206 = sbr.rel (%p204) target = $region36
        $region35: #{tpu_custom_call.1} parent=27 // pred_region
          %207 = dma.done %s200, 256
        $region36: #{tpu_custom_call.1} parent=27 // pred_fallthru
          _
        %s208 = sand.u32 %s45, 1
        %s209 = scalar_lea.sflag [#allocation4], %s208
        %s210 = sand.u32 %s45, 1
        %s211 = smul.addr %s210, 16
        %s212 = scalar_lea.vmem [#allocation3], %s211
        %p213 = pneg %p58
        %p214 = pneg %p55
        %s215 = sand.u32 %s77, 1
        %s216 = scalar_lea.sflag [#allocation6], %s215
        %s217 = sand.u32 %s77, 1
        %s218 = smul.addr %s217, 16
        %s219 = scalar_lea.vmem [#allocation5], %s218
        %p220 = pneg %p90
        %p221 = pneg %p87
        %p222 = pneg %p116
        %p223 = pneg %p113
        %p224 = scmp.lt.s32.totalorder %s23, 1
        %s225 = scalar_select %p224, %s23, 1
        %s226 = scalar_lea.vmem %s2, %s225
        %s227 = sadd.s32 %s23, %s24
        %p228 = scmp.lt.s32.totalorder %s227, 0
        %s229 = scalar_select %p228, %s227, 0
        %s230 = smul.u32 2, %s229
        %s231 = sadd.s32 %s23, %s24
        %p232 = scmp.lt.s32.totalorder %s231, 0
        %s233 = scalar_select %p232, %s231, 0
        %s234 = smul.u32 2, %s233
        %p235 = scmp.lt.s32.totalorder %s23, 1
        %s236 = scalar_select %p235, %s23, 1
        %s237 = scalar_lea.vmem %s2, %s236
        %p238 = scmp.eq.s32.totalorder %s24, 0
        // Predicated region
        $region37: #{tpu_custom_call.1} parent=27 // pred_check
          %p239 = pneg %p238
        $region38: #{tpu_custom_call.1} parent=27 // pred_check_branch
          %241 = sbr.rel (%p239) target = $region40
        $region39: #{tpu_custom_call.1} parent=27 // pred_region
          %242 = vst [vmem:[#allocation2] sm:$0xff] 0.0
          %243 = vst [vmem:[#allocation2 + $0x8] sm:$0xff] 0.0
        $region40: #{tpu_custom_call.1} parent=27 // pred_fallthru
          _
        %v244 = vld [vmem:[%s194] sm:$0xff]
        %v245 = vld [vmem:[%s194 + $0x8] sm:$0xff]
        %v246 = vld [vmem:[%s203] sm:$0xff]
        %v247 = vld [vmem:[%s203 + $0x8] sm:$0xff]
        %v248 = vsub.f32 %v244, %v246
        %v249 = vsub.f32 %v245, %v247
        %v250 = vmul.f32 %v248, %v248
        %v251 = vmul.f32 %v249, %v249
        %s252 = sadd.s32 %s23, %s24
        %s253 = smul.u32 %s252, 16
        %v254 = vlaneseq
        %v255 = vshrl.u32 %v254, 7
        %v256 = vadd.s32 %v255, 8
        %v257 = vstv %s253
        %v258 = vadd.s32 %v255, %v257
        %v259 = vadd.s32 %v256, %v257
        %vm260 = vcmp.lt.s32.totalorder %v258, 16
        %vm261 = vcmp.lt.s32.totalorder %v259, 16
        %v262 = vsel %vm260, %v250, 0.0
        %v263 = vsel %vm261, %v251, 0.0
        %v264 = vld [vmem:[#allocation2] sm:$0xff]
        %v265 = vld [vmem:[#allocation2 + $0x8] sm:$0xff]
        %v266 = vadd.f32 %v264, %v262
        %v267 = vadd.f32 %v265, %v263
        %268 = vst [vmem:[#allocation2] sm:$0xff] %v266
        %269 = vst [vmem:[#allocation2 + $0x8] sm:$0xff] %v267
        // Predicated region
        $region41: #{tpu_custom_call.1} parent=27 // pred_check
          %p270 = pneg %p238
        $region42: #{tpu_custom_call.1} parent=27 // pred_check_branch
          %272 = sbr.rel (%p270) target = $region44
        $region43: #{tpu_custom_call.1} parent=27 // pred_region
          %v273 = vld [vmem:[#allocation2] sm:$0xff]
          %v274 = vld [vmem:[#allocation2 + $0x8] sm:$0xff]
          %v275 = vadd.f32 %v273, %v274
          %276 = vadd.xlane.f32.xlu0 %v275
          %v277 = vpop.xlane.xlu0 %276
          %v278 = vrot.slane %v277, 4
          %v279 = vadd.f32 %v277, %v278
          %v280 = vrot.slane %v279, 2
          %v281 = vadd.f32 %v279, %v280
          %v282 = vrot.slane %v281, 1
          %v283 = vadd.f32 %v281, %v282
          %s284 = vtos %v283
          %v285 = vstv %s284
          %vm286 = vcmask 0
          %287 = vst.msk [vmem:[%s237] sm:$0x1] %vm286, %v285
        $region44: #{tpu_custom_call.1} parent=27 // pred_fallthru
          _
        %p288 = scmp.lt.s32.totalorder %s23, 1
        %s289 = scalar_select %p288, %s23, 1
        %s290 = scalar_lea.vmem %s2, %s289
        // Predicated region
        $region45: #{tpu_custom_call.1} parent=27 // pred_check
          %p291 = pneg %p113
        $region46: #{tpu_custom_call.1} parent=27 // pred_check_branch
          %293 = sbr.rel (%p291) target = $region48
        $region47: #{tpu_custom_call.1} parent=27 // pred_region
          _
        $region48: #{tpu_custom_call.1} parent=27 // pred_fallthru
          _
      $region28: #{tpu_custom_call.1} parent=5 // pred_fallthru
        _
      %p294 = scmp.le.s32.totalorder 2, %s14
      // Predicated region
      $region49: #{tpu_custom_call.1} parent=5 // pred_check
        %p295 = pneg %p294
      $region50: #{tpu_custom_call.1} parent=5 // pred_check_branch
        %297 = sbr.rel (%p295) target = $region52
      $region51: #{tpu_custom_call.1} parent=5 // pred_region
        %s298 = ssub.s32 %s14, 2
        // Predicated region
        $region53: #{tpu_custom_call.1} parent=51 // pred_check
          %p299 = pneg %p119
        $region54: #{tpu_custom_call.1} parent=51 // pred_check_branch
          %301 = sbr.rel (%p299) target = $region56
        $region55: #{tpu_custom_call.1} parent=51 // pred_region
          %p302 = scmp.lt.s32.totalorder %s25, 1
          %s303 = scalar_select %p302, %s25, 1
          %s304 = scalar_lea.vmem %s2, %s303
        $region56: #{tpu_custom_call.1} parent=51 // pred_fallthru
          _
      $region52: #{tpu_custom_call.1} parent=5 // pred_fallthru
        _
    $region6: #{tpu_custom_call.1} parent=1 // loop_footer
      %s18 = sadd.s32 1, %s14
    $region7: #{tpu_custom_call.1} parent=1 // loop_footer_branch
      %13 = sbr.rel target = $region3
    $region8: #{tpu_custom_call.1} parent=1 // loop_exit
      _
    %305 = vsyncpa [#allocation4], 1
    %s306 = scalar_lea.sflag [#allocation4], 1
    %307 = vsyncpa %s306, 1
    %308 = vsyncpa [#allocation6], 1
    %s309 = scalar_lea.sflag [#allocation6], 1
    %310 = vsyncpa %s309, 1

</llo_original>
